<compile_context>
chip_gen: v6e
topology: v6e:2x2x1
jax: 0.10.0
libtpu: 0.0.40
codegen_flags: <defaults>
</compile_context>

<pallas_src>
import jax
import jax.numpy as jnp
from jax.experimental import pallas as pl
from jax.experimental.pallas import tpu as pltpu


def _round_up(x, m):
    return ((x + m - 1) // m) * m


def _cdiv(a, b):
    return (a + b - 1) // b


def _actor_critic_kernel(
    obs_ref,            # [TB, obs_dim]  f32 (cast to bf16 for the MXU)
    w1_ref, b1_ref,     # shared layer 1: obs_dim -> 64       (bf16 / f32)
    w2_ref, b2_ref,     # shared layer 2: 64 -> 64            (bf16 / f32)
    wh1_ref, bh1_ref,   # fused head layer 1: 64 -> 128       (policy|value)
    wh2_ref, bh2_ref,   # fused head layer 2: 128 -> OUT_W    (block-diagonal)
    out_ref,            # [TB, OUT_W]  narrow packed (logits | value | pad)
):
    # bf16 MXU inputs, f32 accumulation; bias-add + ReLU stay f32 (v5e: no bf16 VPU).
    x = obs_ref[...].astype(jnp.bfloat16)

    # ---- shared trunk ----  (Dropout = identity in eval mode)
    h = jnp.dot(x, w1_ref[...], preferred_element_type=jnp.float32) + b1_ref[...]
    h = jnp.maximum(h, 0.0)
    z = jnp.dot(h.astype(jnp.bfloat16), w2_ref[...],
                preferred_element_type=jnp.float32) + b2_ref[...]
    z = jnp.maximum(z, 0.0)

    # ---- fused heads, level 1: [TB,64] @ [64,128] -> [TB,128] ----
    hv = jnp.dot(z.astype(jnp.bfloat16), wh1_ref[...],
                 preferred_element_type=jnp.float32) + bh1_ref[...]
    hv = jnp.maximum(hv, 0.0)

    # ---- fused heads, level 2 (block-diagonal): [TB,128] @ [128,OUT_W] ----
    out = jnp.dot(hv.astype(jnp.bfloat16), wh2_ref[...],
                  preferred_element_type=jnp.float32) + bh2_ref[...]

    out_ref[...] = out.astype(out_ref.dtype)


def pack_params(params):
    """Fuse policy/value head params + pre-cast weights to bf16. Call ONCE, not per forward."""
    obs_dim, hidden = params["w1"].shape        # e.g. 32, 64
    action_dim = params["wp2"].shape[1]
    out_w = _round_up(action_dim + 1, 8)        # narrow packed output width (8 for 6+1)

    wh1 = jnp.concatenate([params["wp1"], params["wv1"]], axis=1)    # [64, 128]
    bh1 = jnp.concatenate([params["bp1"], params["bv1"]], axis=1)    # [1, 128]

    wh2 = jnp.zeros((2 * hidden, out_w), jnp.float32)
    wh2 = wh2.at[:hidden, :action_dim].set(params["wp2"])            # policy block
    wh2 = wh2.at[hidden:, action_dim].set(params["wv2"][:, 0])       # value column
    bh2 = jnp.zeros((1, out_w), jnp.float32)
    bh2 = bh2.at[:, :action_dim].set(params["bp2"])
    bh2 = bh2.at[:, action_dim].set(params["bv2"][0, 0])

    return dict(
        w1=params["w1"].astype(jnp.bfloat16), b1=params["b1"],
        w2=params["w2"].astype(jnp.bfloat16), b2=params["b2"],
        wh1=wh1.astype(jnp.bfloat16), bh1=bh1,
        wh2=wh2.astype(jnp.bfloat16), bh2=bh2,
        obs_dim=obs_dim, hidden=hidden, action_dim=action_dim, out_w=out_w,
    )


def actor_critic_forward(obs, packed, *, block_b=2048):
    """ActorCriticNetwork forward pass in one Pallas kernel.

    obs: [B, obs_dim] float array.  packed: output of pack_params().
    returns: (policy_logits [B, action_dim], value [B, 1]) in float32.
    """
    B, obs_dim = obs.shape
    hidden = packed["hidden"]
    action_dim = packed["action_dim"]
    out_w = packed["out_w"]
    assert obs_dim == packed["obs_dim"]

    # Batch tile: multiple of 8 sublanes, capped at block_b, and small enough that the
    # grid has >= 2 steps when B > 8 (so the "parallel" batch axis splits across v7x's
    # two TensorCores). No host-side padding: Pallas masks the ragged final tile.
    tb = min(block_b, max(8, _round_up(_cdiv(B, 2), 8)))
    grid = (_cdiv(B, tb),)

    args = (
        obs,
        packed["w1"], packed["b1"],
        packed["w2"], packed["b2"],
        packed["wh1"], packed["bh1"],
        packed["wh2"], packed["bh2"],
    )

    # obs / output tile over the batch; every weight/bias stays VMEM-resident.
    const2d = lambda i: (0, 0)
    in_specs = [
        pl.BlockSpec((tb, obs_dim), lambda i: (i, 0)),       # obs (batch-tiled)
        pl.BlockSpec((obs_dim, hidden), const2d),            # w1
        pl.BlockSpec((1, hidden), const2d),                  # b1
        pl.BlockSpec((hidden, hidden), const2d),             # w2
        pl.BlockSpec((1, hidden), const2d),                  # b2
        pl.BlockSpec((hidden, 2 * hidden), const2d),         # wh1
        pl.BlockSpec((1, 2 * hidden), const2d),              # bh1
        pl.BlockSpec((2 * hidden, out_w), const2d),          # wh2
        pl.BlockSpec((1, out_w), const2d),                   # bh2
    ]
    out_specs = pl.BlockSpec((tb, out_w), lambda i: (i, 0))

    # Honest cost estimate: only the (action_dim+1) useful output columns of the
    # final matmul are counted.
    flops = 2 * B * (obs_dim * hidden + hidden * hidden
                     + hidden * 2 * hidden + 2 * hidden * (action_dim + 1))
    weight_bytes = sum(int(a.size) * a.dtype.itemsize for a in args[1:])
    bytes_accessed = (B * obs_dim * obs.dtype.itemsize   # obs read
                      + B * out_w * 4                    # packed output write
                      + weight_bytes)

    packed_out = pl.pallas_call(
        _actor_critic_kernel,
        out_shape=jax.ShapeDtypeStruct((B, out_w), jnp.float32),
        grid=grid,
        in_specs=in_specs,
        out_specs=out_specs,
        compiler_params=pltpu.CompilerParams(
            dimension_semantics=("parallel",),
        ),
        cost_estimate=pl.CostEstimate(
            flops=flops, transcendentals=0, bytes_accessed=bytes_accessed),
    )(*args)

    logits = packed_out[:, :action_dim]
    value = packed_out[:, action_dim:action_dim + 1]
    return logits, value


def _linear_init(key, fan_in, fan_out):
    # Matches PyTorch nn.Linear default: U(-1/sqrt(fan_in), 1/sqrt(fan_in)).
    kw, kb = jax.random.split(key)
    bound = 1.0 / jnp.sqrt(jnp.float32(fan_in))
    w = jax.random.uniform(kw, (fan_in, fan_out), jnp.float32, -bound, bound)
    b = jax.random.uniform(kb, (1, fan_out), jnp.float32, -bound, bound)
    return w, b


def init_params(key, obs_dim, action_dim, hidden=64):
    keys = jax.random.split(key, 6)
    w1, b1 = _linear_init(keys[0], obs_dim, hidden)
    w2, b2 = _linear_init(keys[1], hidden, hidden)
    wp1, bp1 = _linear_init(keys[2], hidden, hidden)
    wp2, bp2 = _linear_init(keys[3], hidden, action_dim)
    wv1, bv1 = _linear_init(keys[4], hidden, 1 * hidden)
    wv2, bv2 = _linear_init(keys[5], hidden, 1)
    return dict(
        w1=w1, b1=b1, w2=w2, b2=b2,
        wp1=wp1, bp1=bp1, wp2=wp2, bp2=bp2,
        wv1=wv1, bv1=bv1, wv2=wv2, bv2=bv2,
    )


def _reference_forward(obs, p):
    # Pure-f32 JAX reference (unfused heads) — semantic ground truth.
    z = jnp.maximum(obs @ p["w1"] + p["b1"], 0.0)
    z = jnp.maximum(z @ p["w2"] + p["b2"], 0.0)
    pol = jnp.maximum(z @ p["wp1"] + p["bp1"], 0.0) @ p["wp2"] + p["bp2"]
    val = jnp.maximum(z @ p["wv1"] + p["bv1"], 0.0) @ p["wv2"] + p["bv2"]
    return pol, val


def _bf16_dot(x, w):
    return jnp.dot(x.astype(jnp.bfloat16), w.astype(jnp.bfloat16),
                   preferred_element_type=jnp.float32)


def _reference_forward_bf16(obs, p):
    # Mixed-precision reference matching the kernel's bf16-input / f32-accum matmuls.
    z = jnp.maximum(_bf16_dot(obs, p["w1"]) + p["b1"], 0.0)
    z = jnp.maximum(_bf16_dot(z, p["w2"]) + p["b2"], 0.0)
    hp = jnp.maximum(_bf16_dot(z, p["wp1"]) + p["bp1"], 0.0)
    hv = jnp.maximum(_bf16_dot(z, p["wv1"]) + p["bv1"], 0.0)
    pol = _bf16_dot(hp, p["wp2"]) + p["bp2"]
    val = _bf16_dot(hv, p["wv2"]) + p["bv2"]
    return pol, val


if __name__ == "__main__":
    key = jax.random.PRNGKey(0)
    k_obs, k_params = jax.random.split(key)

    B, OBS_DIM, ACTION_DIM = 8, 32, 6
    obs = jax.random.normal(k_obs, (B, OBS_DIM), jnp.float32)
    params = init_params(k_params, OBS_DIM, ACTION_DIM)
    packed = pack_params(params)   # pack + bf16-cast once (hoisted out of forward)

    logits, value = actor_critic_forward(obs, packed)
    logits = jax.block_until_ready(logits)
    value = jax.block_until_ready(value)

    assert logits.shape == (B, ACTION_DIM)
    assert value.shape == (B, 1)

    # Tight check against a reference using the same bf16-input / f32-accum matmuls.
    rl_b, rv_b = _reference_forward_bf16(obs, params)
    assert jnp.allclose(logits, rl_b, atol=1e-2, rtol=1e-2)
    assert jnp.allclose(value, rv_b, atol=1e-2, rtol=1e-2)
    # Looser check against the pure-f32 semantic reference (bf16 quantization noise).
    rl_f, rv_f = _reference_forward(obs, params)
    assert jnp.allclose(logits, rl_f, atol=1e-1, rtol=1e-1)
    assert jnp.allclose(value, rv_f, atol=1e-1, rtol=1e-1)

    # Also exercise the multi-step batch grid with a ragged final tile (no host pad).
    B2 = 600
    obs2 = jax.random.normal(jax.random.PRNGKey(1), (B2, OBS_DIM), jnp.float32)
    l2, v2 = actor_critic_forward(obs2, packed, block_b=256)
    l2 = jax.block_until_ready(l2)
    v2 = jax.block_until_ready(v2)
    rl2, rv2 = _reference_forward_bf16(obs2, params)
    assert l2.shape == (B2, ACTION_DIM) and v2.shape == (B2, 1)
    assert jnp.allclose(l2, rl2, atol=1e-2, rtol=1e-2)
    assert jnp.allclose(v2, rv2, atol=1e-2, rtol=1e-2)

    print("KERNEL_OK")
</pallas_src>

<mosaic_0001>
module attributes {stable_mosaic.version = 11 : i64} {
  func.func @_actor_critic_kernel(%arg0: i32, %arg1: memref<8x32xf32, #tpu.memory_space<vmem>>, %arg2: memref<32x64xbf16, #tpu.memory_space<vmem>>, %arg3: memref<1x64xf32, #tpu.memory_space<vmem>>, %arg4: memref<64x64xbf16, #tpu.memory_space<vmem>>, %arg5: memref<1x64xf32, #tpu.memory_space<vmem>>, %arg6: memref<64x128xbf16, #tpu.memory_space<vmem>>, %arg7: memref<1x128xf32, #tpu.memory_space<vmem>>, %arg8: memref<128x8xbf16, #tpu.memory_space<vmem>>, %arg9: memref<1x8xf32, #tpu.memory_space<vmem>>, %arg10: memref<8x8xf32, #tpu.memory_space<vmem>>) attributes {dimension_semantics = [#tpu.dimension_semantics<parallel>], iteration_bounds = array<i64: 1>, scalar_prefetch = 0 : i64, scratch_operands = 0 : i64, tpu.core_type = #tpu.core_type<tc>, window_params = [{transform_indices = @transform_0, window_bounds = array<i64: 8, 32>}, {pipeline_mode = #tpu.pipeline_mode<synchronous>, transform_indices = @transform_1, window_bounds = array<i64: 32, 64>}, {pipeline_mode = #tpu.pipeline_mode<synchronous>, transform_indices = @transform_2, window_bounds = array<i64: 1, 64>}, {pipeline_mode = #tpu.pipeline_mode<synchronous>, transform_indices = @transform_3, window_bounds = array<i64: 64, 64>}, {pipeline_mode = #tpu.pipeline_mode<synchronous>, transform_indices = @transform_4, window_bounds = array<i64: 1, 64>}, {pipeline_mode = #tpu.pipeline_mode<synchronous>, transform_indices = @transform_5, window_bounds = array<i64: 64, 128>}, {pipeline_mode = #tpu.pipeline_mode<synchronous>, transform_indices = @transform_6, window_bounds = array<i64: 1, 128>}, {pipeline_mode = #tpu.pipeline_mode<synchronous>, transform_indices = @transform_7, window_bounds = array<i64: 128, 8>}, {pipeline_mode = #tpu.pipeline_mode<synchronous>, transform_indices = @transform_8, window_bounds = array<i64: 1, 8>}, {transform_indices = @transform_9, window_bounds = array<i64: 8, 8>}]} {
    %c0 = arith.constant 0 : index
    %c0_0 = arith.constant 0 : index
    %0 = vector.load %arg1[%c0, %c0_0] : memref<8x32xf32, #tpu.memory_space<vmem>>, vector<8x32xf32>
    %1 = arith.truncf %0 : vector<8x32xf32> to vector<8x32xbf16>
    %c0_1 = arith.constant 0 : index
    %c0_2 = arith.constant 0 : index
    %2 = vector.load %arg2[%c0_1, %c0_2] : memref<32x64xbf16, #tpu.memory_space<vmem>>, vector<32x64xbf16>
    %cst = arith.constant dense<0.000000e+00> : vector<8x64xf32>
    %3 = tpu.matmul %1, %2, %cst {dimension_numbers = #tpu.dot_dimension_numbers<[1], [0], [0], [1], [0, 0, 1, 1], [], []>} : vector<8x32xbf16>, vector<32x64xbf16>, vector<8x64xf32> -> vector<8x64xf32>
    %c0_3 = arith.constant 0 : index
    %c0_4 = arith.constant 0 : index
    %4 = vector.load %arg3[%c0_3, %c0_4] : memref<1x64xf32, #tpu.memory_space<vmem>>, vector<1x64xf32>
    %5 = vector.broadcast %4 : vector<1x64xf32> to vector<8x64xf32>
    %6 = arith.addf %3, %5 : vector<8x64xf32>
    %cst_5 = arith.constant 0.000000e+00 : f32
    %7 = vector.broadcast %cst_5 : f32 to vector<8x64xf32>
    %8 = arith.maximumf %6, %7 : vector<8x64xf32>
    %9 = arith.truncf %8 : vector<8x64xf32> to vector<8x64xbf16>
    %c0_6 = arith.constant 0 : index
    %c0_7 = arith.constant 0 : index
    %10 = vector.load %arg4[%c0_6, %c0_7] : memref<64x64xbf16, #tpu.memory_space<vmem>>, vector<64x64xbf16>
    %cst_8 = arith.constant dense<0.000000e+00> : vector<8x64xf32>
    %11 = tpu.matmul %9, %10, %cst_8 {dimension_numbers = #tpu.dot_dimension_numbers<[1], [0], [0], [1], [0, 0, 1, 1], [], []>} : vector<8x64xbf16>, vector<64x64xbf16>, vector<8x64xf32> -> vector<8x64xf32>
    %c0_9 = arith.constant 0 : index
    %c0_10 = arith.constant 0 : index
    %12 = vector.load %arg5[%c0_9, %c0_10] : memref<1x64xf32, #tpu.memory_space<vmem>>, vector<1x64xf32>
    %13 = vector.broadcast %12 : vector<1x64xf32> to vector<8x64xf32>
    %14 = arith.addf %11, %13 : vector<8x64xf32>
    %cst_11 = arith.constant 0.000000e+00 : f32
    %15 = vector.broadcast %cst_11 : f32 to vector<8x64xf32>
    %16 = arith.maximumf %14, %15 : vector<8x64xf32>
    %17 = arith.truncf %16 : vector<8x64xf32> to vector<8x64xbf16>
    %c0_12 = arith.constant 0 : index
    %c0_13 = arith.constant 0 : index
    %18 = vector.load %arg6[%c0_12, %c0_13] : memref<64x128xbf16, #tpu.memory_space<vmem>>, vector<64x128xbf16>
    %cst_14 = arith.constant dense<0.000000e+00> : vector<8x128xf32>
    %19 = tpu.matmul %17, %18, %cst_14 {dimension_numbers = #tpu.dot_dimension_numbers<[1], [0], [0], [1], [0, 0, 1, 1], [], []>} : vector<8x64xbf16>, vector<64x128xbf16>, vector<8x128xf32> -> vector<8x128xf32>
    %c0_15 = arith.constant 0 : index
    %c0_16 = arith.constant 0 : index
    %20 = vector.load %arg7[%c0_15, %c0_16] : memref<1x128xf32, #tpu.memory_space<vmem>>, vector<1x128xf32>
    %21 = vector.broadcast %20 : vector<1x128xf32> to vector<8x128xf32>
    %22 = arith.addf %19, %21 : vector<8x128xf32>
    %cst_17 = arith.constant 0.000000e+00 : f32
    %23 = vector.broadcast %cst_17 : f32 to vector<8x128xf32>
    %24 = arith.maximumf %22, %23 : vector<8x128xf32>
    %25 = arith.truncf %24 : vector<8x128xf32> to vector<8x128xbf16>
    %c0_18 = arith.constant 0 : index
    %c0_19 = arith.constant 0 : index
    %26 = vector.load %arg8[%c0_18, %c0_19] : memref<128x8xbf16, #tpu.memory_space<vmem>>, vector<128x8xbf16>
    %cst_20 = arith.constant dense<0.000000e+00> : vector<8x8xf32>
    %27 = tpu.matmul %25, %26, %cst_20 {dimension_numbers = #tpu.dot_dimension_numbers<[1], [0], [0], [1], [0, 0, 1, 1], [], []>} : vector<8x128xbf16>, vector<128x8xbf16>, vector<8x8xf32> -> vector<8x8xf32>
    %c0_21 = arith.constant 0 : index
    %c0_22 = arith.constant 0 : index
    %28 = vector.load %arg9[%c0_21, %c0_22] : memref<1x8xf32, #tpu.memory_space<vmem>>, vector<1x8xf32>
    %29 = vector.broadcast %28 : vector<1x8xf32> to vector<8x8xf32>
    %30 = arith.addf %27, %29 : vector<8x8xf32>
    %c0_23 = arith.constant 0 : index
    %c0_24 = arith.constant 0 : index
    %31 = vector.load %arg10[%c0_23, %c0_24] : memref<8x8xf32, #tpu.memory_space<vmem>>, vector<8x8xf32>
    tpu.vector_store %arg10[%c0_23, %c0_24], %30 {strides = array<i32>} : memref<8x8xf32, #tpu.memory_space<vmem>>, vector<8x8xf32>,
    return
  }
  func.func @transform_0(%arg0: i32) -> (i32, i32) {
    %c0_i32 = arith.constant 0 : i32
    %c0_i32_0 = arith.constant 0 : i32
    return %arg0, %c0_i32 : i32, i32
  }
  func.func @transform_1(%arg0: i32) -> (i32, i32) {
    %c0_i32 = arith.constant 0 : i32
    %c0_i32_0 = arith.constant 0 : i32
    %c0_i32_1 = arith.constant 0 : i32
    return %c0_i32, %c0_i32_0 : i32, i32
  }
  func.func @transform_2(%arg0: i32) -> (i32, i32) {
    %c0_i32 = arith.constant 0 : i32
    %c0_i32_0 = arith.constant 0 : i32
    %c0_i32_1 = arith.constant 0 : i32
    return %c0_i32, %c0_i32_0 : i32, i32
  }
  func.func @transform_3(%arg0: i32) -> (i32, i32) {
    %c0_i32 = arith.constant 0 : i32
    %c0_i32_0 = arith.constant 0 : i32
    %c0_i32_1 = arith.constant 0 : i32
    return %c0_i32, %c0_i32_0 : i32, i32
  }
  func.func @transform_4(%arg0: i32) -> (i32, i32) {
    %c0_i32 = arith.constant 0 : i32
    %c0_i32_0 = arith.constant 0 : i32
    %c0_i32_1 = arith.constant 0 : i32
    return %c0_i32, %c0_i32_0 : i32, i32
  }
  func.func @transform_5(%arg0: i32) -> (i32, i32) {
    %c0_i32 = arith.constant 0 : i32
    %c0_i32_0 = arith.constant 0 : i32
    %c0_i32_1 = arith.constant 0 : i32
    return %c0_i32, %c0_i32_0 : i32, i32
  }
  func.func @transform_6(%arg0: i32) -> (i32, i32) {
    %c0_i32 = arith.constant 0 : i32
    %c0_i32_0 = arith.constant 0 : i32
    %c0_i32_1 = arith.constant 0 : i32
    return %c0_i32, %c0_i32_0 : i32, i32
  }
  func.func @transform_7(%arg0: i32) -> (i32, i32) {
    %c0_i32 = arith.constant 0 : i32
    %c0_i32_0 = arith.constant 0 : i32
    %c0_i32_1 = arith.constant 0 : i32
    return %c0_i32, %c0_i32_0 : i32, i32
  }
  func.func @transform_8(%arg0: i32) -> (i32, i32) {
    %c0_i32 = arith.constant 0 : i32
    %c0_i32_0 = arith.constant 0 : i32
    %c0_i32_1 = arith.constant 0 : i32
    return %c0_i32, %c0_i32_0 : i32, i32
  }
  func.func @transform_9(%arg0: i32) -> (i32, i32) {
    %c0_i32 = arith.constant 0 : i32
    %c0_i32_0 = arith.constant 0 : i32
    return %arg0, %c0_i32 : i32, i32
  }
}

</mosaic_0001>

<llo_original>
// kernel: tpu_custom_call.1
$region0: #{tpu_custom_call.1}
  #allocation0 [shape = 'u32[]', space=smem, size = 0x4, offset = 0x4, fixed_abs, tag = 'smem constant byte address 0x4 - core index']
  #allocation1 [shape = 'u32[144,128]{1,0:T(1,128)}', space=vmem, size = 0x12000, scoped, tag = 'internal scratch']
  %s0 = inlined_call_operand.hbm [shape: f32[8,32], index: 0, kind: input, shape index: {}]
  %s1 = inlined_call_operand.hbm [shape: bf16[32,64], index: 1, kind: input, shape index: {}]
  %s2 = inlined_call_operand.vmem [shape: f32[1,64], index: 2, kind: input, shape index: {}]
  %s3 = inlined_call_operand.vmem [shape: bf16[64,64], index: 3, kind: input, shape index: {}]
  %s4 = inlined_call_operand.vmem [shape: f32[1,64], index: 4, kind: input, shape index: {}]
  %s5 = inlined_call_operand.vmem [shape: bf16[64,128], index: 5, kind: input, shape index: {}]
  %s6 = inlined_call_operand.vmem [shape: f32[1,128], index: 6, kind: input, shape index: {}]
  %s7 = inlined_call_operand.vmem [shape: bf16[128,8], index: 7, kind: input, shape index: {}]
  %s8 = inlined_call_operand.vmem [shape: f32[1,8], index: 8, kind: input, shape index: {}]
  %s9 = inlined_call_operand.hbm [shape: f32[8,8], index: 9, kind: output, shape index: {}]
  %s10 = sld [smem:[#allocation0]]
  $region54: #{tpu_custom_call.1} parent=0
    _
  %s12 = ssub.s32 1, %s10
  %s13 = scalar_select 0, %s12, %s10
  $region1: #{tpu_custom_call.1} parent=0
    #allocation2 [shape = 'u8[4096]{0}', space=vmem, size = 0x1000, scoped, tag = 'input window, operand 0, single buffered']
    #allocation3 [shape = 's32[1]{0}', space=sflag, size = 0x4, scoped, tag = 'scoped memory for tpu_custom_call.1']
    #allocation4 [shape = 's32[1]{0}', space=sflag, size = 0x4, scoped, tag = 'scoped memory for tpu_custom_call.1']
    #allocation5 [shape = 'u8[8192]{0}', space=vmem, size = 0x2000, scoped, tag = 'input window, operand 1, single buffered']
    #allocation6 [shape = 's32[1]{0}', space=sflag, size = 0x4, scoped, tag = 'scoped memory for tpu_custom_call.1']
    #allocation7 [shape = 'u8[4096]{0}', space=vmem, size = 0x1000, scoped, tag = 'output window, operand 0, single buffered']
    %14 = vsyncpa [#allocation3], 0
    %15 = vsyncpa [#allocation6], 0
    %16 = vsyncpa [#allocation4], 0
    // Predicated region
    $region2: #{tpu_custom_call.1} parent=1 // pred_check
      _
    $region3: #{tpu_custom_call.1} parent=1 // pred_check_branch
      %18 = sbr.rel (0) target = $region5
    $region4: #{tpu_custom_call.1} parent=1 // pred_region
      %s20 = ssub.s32 128, 128
      %21 = vsyncadd [#allocation3], %s20
      %s23 = sshll.u32 [#allocation2], 4
      %s24 = int_to_ptr.vmem [resolvable:$true] %s23
      %26 = dma.hbm_to_vmem [thread:$0]  %s0, 128, %s24, [#allocation3]
    $region5: #{tpu_custom_call.1} parent=1 // pred_fallthru
      _
    // Predicated region
    $region6: #{tpu_custom_call.1} parent=1 // pred_check
      _
    $region7: #{tpu_custom_call.1} parent=1 // pred_check_branch
      %28 = sbr.rel (0) target = $region9
    $region8: #{tpu_custom_call.1} parent=1 // pred_region
      %s30 = ssub.s32 256, 256
      %31 = vsyncadd [#allocation6], %s30
      %s32 = sshll.u32 [#allocation5], 4
      %s33 = int_to_ptr.vmem [resolvable:$true] %s32
      %38 = dma.hbm_to_vmem [thread:$0]  %s1, 256, %s33, [#allocation6], 64, 64, 4
    $region9: #{tpu_custom_call.1} parent=1 // pred_fallthru
      _
    // Predicated region
    $region10: #{tpu_custom_call.1} parent=1 // pred_check
      _
    $region11: #{tpu_custom_call.1} parent=1 // pred_check_branch
      %40 = sbr.rel (0) target = $region13
    $region12: #{tpu_custom_call.1} parent=1 // pred_region
      _
    $region13: #{tpu_custom_call.1} parent=1 // pred_fallthru
      _
    // Predicated region
    $region14: #{tpu_custom_call.1} parent=1 // pred_check
      _
    $region15: #{tpu_custom_call.1} parent=1 // pred_check_branch
      %42 = sbr.rel (0) target = $region17
    $region16: #{tpu_custom_call.1} parent=1 // pred_region
      _
    $region17: #{tpu_custom_call.1} parent=1 // pred_fallthru
      _
    // Predicated region
    $region18: #{tpu_custom_call.1} parent=1 // pred_check
      _
    $region19: #{tpu_custom_call.1} parent=1 // pred_check_branch
      %44 = sbr.rel (0) target = $region21
    $region20: #{tpu_custom_call.1} parent=1 // pred_region
      _
    $region21: #{tpu_custom_call.1} parent=1 // pred_fallthru
      _
    // Predicated region
    $region22: #{tpu_custom_call.1} parent=1 // pred_check
      _
    $region23: #{tpu_custom_call.1} parent=1 // pred_check_branch
      %46 = sbr.rel (0) target = $region25
    $region24: #{tpu_custom_call.1} parent=1 // pred_region
      _
    $region25: #{tpu_custom_call.1} parent=1 // pred_fallthru
      _
    // Predicated region
    $region26: #{tpu_custom_call.1} parent=1 // pred_check
      _
    $region27: #{tpu_custom_call.1} parent=1 // pred_check_branch
      %48 = sbr.rel (0) target = $region29
    $region28: #{tpu_custom_call.1} parent=1 // pred_region
      _
    $region29: #{tpu_custom_call.1} parent=1 // pred_fallthru
      _
    // Predicated region
    $region30: #{tpu_custom_call.1} parent=1 // pred_check
      _
    $region31: #{tpu_custom_call.1} parent=1 // pred_check_branch
      %50 = sbr.rel (0) target = $region33
    $region32: #{tpu_custom_call.1} parent=1 // pred_region
      _
    $region33: #{tpu_custom_call.1} parent=1 // pred_fallthru
      _
    // Predicated region
    $region34: #{tpu_custom_call.1} parent=1 // pred_check
      _
    $region35: #{tpu_custom_call.1} parent=1 // pred_check_branch
      %52 = sbr.rel (0) target = $region37
    $region36: #{tpu_custom_call.1} parent=1 // pred_region
      _
    $region37: #{tpu_custom_call.1} parent=1 // pred_fallthru
      _
    // Predicated region
    $region38: #{tpu_custom_call.1} parent=1 // pred_check
      _
    $region39: #{tpu_custom_call.1} parent=1 // pred_check_branch
      %54 = sbr.rel (0) target = $region41
    $region40: #{tpu_custom_call.1} parent=1 // pred_region
      %55 = dma.done [#allocation3], 128
    $region41: #{tpu_custom_call.1} parent=1 // pred_fallthru
      _
    // Predicated region
    $region42: #{tpu_custom_call.1} parent=1 // pred_check
      _
    $region43: #{tpu_custom_call.1} parent=1 // pred_check_branch
      %57 = sbr.rel (0) target = $region45
    $region44: #{tpu_custom_call.1} parent=1 // pred_region
      %58 = dma.done [#allocation6], 256
    $region45: #{tpu_custom_call.1} parent=1 // pred_fallthru
      _
    %v60 = vld [vmem:[#allocation2] sm:$0xff]
    %v61 = vpack.c.bf16 %v60, %v60
    %v62 = vld [vmem:[#allocation5] sm:$0xf]
    %v63 = vld [vmem:[#allocation5 + $0x4] sm:$0xf]
    %v64 = vld [vmem:[#allocation5 + $0x8] sm:$0xf]
    %v65 = vld [vmem:[#allocation5 + $0xc] sm:$0xf]
    %v66 = vld [vmem:[%s2] sm:$0x1]
    %v68 = vlaneseq
    %v69 = vshrl.u32 %v68, 7
    %v70 = vsub.s32 0, %v69
    %v71 = vrot.slane %v66, %v70
    %v77 = vunpack.c.l.b16 %v62
    %v78 = vunpack.c.l.b16 %v63
    %v79 = vunpack.c.l.b16 %v64
    %v80 = vunpack.c.l.b16 %v65
    %v81 = vpack.c.b16 %v78, %v77
    %v82 = vpack.c.b16 %v80, %v79
    %vm85 = vcmask 261120
    %v87 = vsel %vm85, %v61, 0
    %89 = vmatprep.subr.bf16.mxu0 0
    %90 = vmatpush1.bf16.msra.mxu0 0
    %91 = vmatprep.subr.bf16.mxu0 0
    %92 = vmatpush1.bf16.msra.mxu0 0
    %93 = vmatprep.subr.bf16.mxu0 0
    %94 = vmatpush1.bf16.msra.mxu0 0
    %95 = vmatprep.subr.bf16.mxu0 0
    %96 = vmatpush1.bf16.msra.mxu0 0
    %97 = vmatprep.subr.bf16.mxu0 0
    %98 = vmatpush1.bf16.msra.mxu0 0
    %99 = vmatprep.subr.bf16.mxu0 0
    %100 = vmatpush1.bf16.msra.mxu0 0
    %101 = vmatprep.subr.bf16.mxu0 0
    %102 = vmatpush1.bf16.msra.mxu0 %v82
    %103 = vmatprep.subr.bf16.mxu0 0
    %104 = vmatpush1.bf16.msra.mxu0 %v81
    %105 = vmatprep.subr.bf16.mxu0 0
    %106 = vmatpush2.bf16.msra.mxu0 0
    %107 = vmatprep.subr.bf16.mxu0 0
    %108 = vmatpush2.bf16.msra.mxu0 0
    %109 = vmatprep.subr.bf16.mxu0 0
    %110 = vmatpush2.bf16.msra.mxu0 0
    %111 = vmatprep.subr.bf16.mxu0 0
    %112 = vmatpush2.bf16.msra.mxu0 0
    %113 = vmatprep.subr.bf16.mxu0 0
    %114 = vmatpush2.bf16.msra.mxu0 0
    %115 = vmatprep.subr.bf16.mxu0 0
    %116 = vmatpush2.bf16.msra.mxu0 0
    %117 = vmatprep.subr.bf16.mxu0 0
    %118 = vmatpush2.bf16.msra.mxu0 0
    %119 = vmatprep.subr.bf16.mxu0 0
    %120 = vmatpush2.bf16.msra.mxu0 0
    %121 = vmatprep.mubr.bf16.mxu0 0
    %122 = vmatmul.mubr.bf16.gmra.mxu0 %v87
    %v123 = vpop.f32.mrf.mxu0
    %v124 = vadd.f32 %v71, %v123
    %v125 = vpop.f32.mrf.mxu0
    %v126 = vpop.f32.mrf.mxu0
    %v127 = vpop.f32.mrf.mxu0
    %128 = vdwg.mxu0
    %v129 = vmax.f32 %v124, 0.0
    %v130 = vpack.c.bf16 %v129, %v129
    %v131 = vld [vmem:[%s3] sm:$0xf]
    %v132 = vld [vmem:[%s3 + $0x4] sm:$0xf]
    %v133 = vld [vmem:[%s3 + $0x8] sm:$0xf]
    %v134 = vld [vmem:[%s3 + $0xc] sm:$0xf]
    %v135 = vld [vmem:[%s3 + $0x10] sm:$0xf]
    %v136 = vld [vmem:[%s3 + $0x14] sm:$0xf]
    %v137 = vld [vmem:[%s3 + $0x18] sm:$0xf]
    %v138 = vld [vmem:[%s3 + $0x1c] sm:$0xf]
    %v139 = vld [vmem:[%s4] sm:$0x1]
    %v141 = vlaneseq
    %v142 = vshrl.u32 %v141, 7
    %v143 = vsub.s32 0, %v142
    %v144 = vrot.slane %v139, %v143
    %v154 = vunpack.c.l.b16 %v131
    %v155 = vunpack.c.l.b16 %v132
    %v156 = vunpack.c.l.b16 %v133
    %v157 = vunpack.c.l.b16 %v134
    %v158 = vunpack.c.l.b16 %v135
    %v159 = vunpack.c.l.b16 %v136
    %v160 = vunpack.c.l.b16 %v137
    %v161 = vunpack.c.l.b16 %v138
    %v162 = vpack.c.b16 %v155, %v154
    %v163 = vpack.c.b16 %v157, %v156
    %v164 = vpack.c.b16 %v159, %v158
    %v165 = vpack.c.b16 %v161, %v160
    %vm170 = vcmask 523264
    %v172 = vsel %vm170, %v130, 0
    %174 = vmatprep.subr.bf16.mxu0 0
    %175 = vmatpush1.bf16.msra.mxu0 0
    %176 = vmatprep.subr.bf16.mxu0 0
    %177 = vmatpush1.bf16.msra.mxu0 0
    %178 = vmatprep.subr.bf16.mxu0 0
    %179 = vmatpush1.bf16.msra.mxu0 0
    %180 = vmatprep.subr.bf16.mxu0 0
    %181 = vmatpush1.bf16.msra.mxu0 0
    %182 = vmatprep.subr.bf16.mxu0 0
    %183 = vmatpush1.bf16.msra.mxu0 %v165
    %184 = vmatprep.subr.bf16.mxu0 0
    %185 = vmatpush1.bf16.msra.mxu0 %v164
    %186 = vmatprep.subr.bf16.mxu0 0
    %187 = vmatpush1.bf16.msra.mxu0 %v163
    %188 = vmatprep.subr.bf16.mxu0 0
    %189 = vmatpush1.bf16.msra.mxu0 %v162
    %190 = vmatprep.subr.bf16.mxu0 0
    %191 = vmatpush2.bf16.msra.mxu0 0
    %192 = vmatprep.subr.bf16.mxu0 0
    %193 = vmatpush2.bf16.msra.mxu0 0
    %194 = vmatprep.subr.bf16.mxu0 0
    %195 = vmatpush2.bf16.msra.mxu0 0
    %196 = vmatprep.subr.bf16.mxu0 0
    %197 = vmatpush2.bf16.msra.mxu0 0
    %198 = vmatprep.subr.bf16.mxu0 0
    %199 = vmatpush2.bf16.msra.mxu0 0
    %200 = vmatprep.subr.bf16.mxu0 0
    %201 = vmatpush2.bf16.msra.mxu0 0
    %202 = vmatprep.subr.bf16.mxu0 0
    %203 = vmatpush2.bf16.msra.mxu0 0
    %204 = vmatprep.subr.bf16.mxu0 0
    %205 = vmatpush2.bf16.msra.mxu0 0
    %206 = vmatprep.mubr.bf16.mxu0 0
    %207 = vmatmul.mubr.bf16.gmra.mxu0 %v172
    %v208 = vpop.f32.mrf.mxu0
    %v209 = vadd.f32 %v144, %v208
    %v210 = vpop.f32.mrf.mxu0
    %v211 = vpop.f32.mrf.mxu0
    %v212 = vpop.f32.mrf.mxu0
    %213 = vdwg.mxu0
    %v214 = vmax.f32 %v209, 0.0
    %v215 = vpack.c.bf16 %v214, %v214
    %v216 = vld [vmem:[%s5] sm:$0xf]
    %v217 = vld [vmem:[%s5 + $0x4] sm:$0xf]
    %v218 = vld [vmem:[%s5 + $0x8] sm:$0xf]
    %v219 = vld [vmem:[%s5 + $0xc] sm:$0xf]
    %v220 = vld [vmem:[%s5 + $0x10] sm:$0xf]
    %v221 = vld [vmem:[%s5 + $0x14] sm:$0xf]
    %v222 = vld [vmem:[%s5 + $0x18] sm:$0xf]
    %v223 = vld [vmem:[%s5 + $0x1c] sm:$0xf]
    %v224 = vld [vmem:[%s6] sm:$0x1]
    %v226 = vlaneseq
    %v227 = vshrl.u32 %v226, 7
    %v228 = vsub.s32 0, %v227
    %v229 = vrot.slane %v224, %v228
    %v239 = vunpack.c.l.b16 %v216
    %v240 = vunpack.c.l.b16 %v217
    %v241 = vunpack.c.l.b16 %v218
    %v242 = vunpack.c.l.b16 %v219
    %v243 = vunpack.c.l.b16 %v220
    %v244 = vunpack.c.l.b16 %v221
    %v245 = vunpack.c.l.b16 %v222
    %v246 = vunpack.c.l.b16 %v223
    %v247 = vpack.c.b16 %v240, %v239
    %v248 = vpack.c.b16 %v242, %v241
    %v249 = vpack.c.b16 %v244, %v243
    %v250 = vpack.c.b16 %v246, %v245
    %v256 = vsel %vm170, %v215, 0
    %258 = vmatprep.subr.bf16.mxu0 0
    %259 = vmatpush1.bf16.msra.mxu0 0
    %260 = vmatprep.subr.bf16.mxu0 0
    %261 = vmatpush1.bf16.msra.mxu0 0
    %262 = vmatprep.subr.bf16.mxu0 0
    %263 = vmatpush1.bf16.msra.mxu0 0
    %264 = vmatprep.subr.bf16.mxu0 0
    %265 = vmatpush1.bf16.msra.mxu0 0
    %266 = vmatprep.subr.bf16.mxu0 0
    %267 = vmatpush1.bf16.msra.mxu0 %v250
    %268 = vmatprep.subr.bf16.mxu0 0
    %269 = vmatpush1.bf16.msra.mxu0 %v249
    %270 = vmatprep.subr.bf16.mxu0 0
    %271 = vmatpush1.bf16.msra.mxu0 %v248
    %272 = vmatprep.subr.bf16.mxu0 0
    %273 = vmatpush1.bf16.msra.mxu0 %v247
    %274 = vmatprep.subr.bf16.mxu0 0
    %275 = vmatpush2.bf16.msra.mxu0 0
    %276 = vmatprep.subr.bf16.mxu0 0
    %277 = vmatpush2.bf16.msra.mxu0 0
    %278 = vmatprep.subr.bf16.mxu0 0
    %279 = vmatpush2.bf16.msra.mxu0 0
    %280 = vmatprep.subr.bf16.mxu0 0
    %281 = vmatpush2.bf16.msra.mxu0 0
    %282 = vmatprep.subr.bf16.mxu0 0
    %283 = vmatpush2.bf16.msra.mxu0 0
    %284 = vmatprep.subr.bf16.mxu0 0
    %285 = vmatpush2.bf16.msra.mxu0 0
    %286 = vmatprep.subr.bf16.mxu0 0
    %287 = vmatpush2.bf16.msra.mxu0 0
    %288 = vmatprep.subr.bf16.mxu0 0
    %289 = vmatpush2.bf16.msra.mxu0 0
    %290 = vmatprep.mubr.bf16.mxu0 0
    %291 = vmatmul.mubr.bf16.gmra.mxu0 %v256
    %v292 = vpop.f32.mrf.mxu0
    %v293 = vadd.f32 %v229, %v292
    %v294 = vpop.f32.mrf.mxu0
    %v295 = vpop.f32.mrf.mxu0
    %v296 = vpop.f32.mrf.mxu0
    %297 = vdwg.mxu0
    %v298 = vmax.f32 %v293, 0.0
    %v299 = vpack.c.bf16 %v298, %v298
    %v300 = vld [vmem:[%s7] sm:$0xf]
    %v301 = vld [vmem:[%s7 + $0x4] sm:$0xf]
    %v302 = vld [vmem:[%s7 + $0x8] sm:$0xf]
    %v303 = vld [vmem:[%s7 + $0xc] sm:$0xf]
    %v304 = vld [vmem:[%s7 + $0x10] sm:$0xf]
    %v305 = vld [vmem:[%s7 + $0x14] sm:$0xf]
    %v306 = vld [vmem:[%s7 + $0x18] sm:$0xf]
    %v307 = vld [vmem:[%s7 + $0x1c] sm:$0xf]
    %v308 = vld [vmem:[%s7 + $0x20] sm:$0xf]
    %v309 = vld [vmem:[%s7 + $0x24] sm:$0xf]
    %v310 = vld [vmem:[%s7 + $0x28] sm:$0xf]
    %v311 = vld [vmem:[%s7 + $0x2c] sm:$0xf]
    %v312 = vld [vmem:[%s7 + $0x30] sm:$0xf]
    %v313 = vld [vmem:[%s7 + $0x34] sm:$0xf]
    %v314 = vld [vmem:[%s7 + $0x38] sm:$0xf]
    %v315 = vld [vmem:[%s7 + $0x3c] sm:$0xf]
    %v316 = vld [vmem:[%s8] sm:$0x1]
    %v318 = vlaneseq
    %v319 = vshrl.u32 %v318, 7
    %v320 = vsub.s32 0, %v319
    %v321 = vrot.slane %v316, %v320
    %v339 = vunpack.c.l.b16 %v300
    %v340 = vunpack.c.l.b16 %v301
    %v341 = vunpack.c.l.b16 %v302
    %v342 = vunpack.c.l.b16 %v303
    %v343 = vunpack.c.l.b16 %v304
    %v344 = vunpack.c.l.b16 %v305
    %v345 = vunpack.c.l.b16 %v306
    %v346 = vunpack.c.l.b16 %v307
    %v347 = vunpack.c.l.b16 %v308
    %v348 = vunpack.c.l.b16 %v309
    %v349 = vunpack.c.l.b16 %v310
    %v350 = vunpack.c.l.b16 %v311
    %v351 = vunpack.c.l.b16 %v312
    %v352 = vunpack.c.l.b16 %v313
    %v353 = vunpack.c.l.b16 %v314
    %v354 = vunpack.c.l.b16 %v315
    %v355 = vpack.c.b16 %v340, %v339
    %v356 = vpack.c.b16 %v342, %v341
    %v357 = vpack.c.b16 %v344, %v343
    %v358 = vpack.c.b16 %v346, %v345
    %v359 = vpack.c.b16 %v348, %v347
    %v360 = vpack.c.b16 %v350, %v349
    %v361 = vpack.c.b16 %v352, %v351
    %v362 = vpack.c.b16 %v354, %v353
    %371 = vmatprep.subr.bf16.mxu0 0
    %372 = vmatpush1.bf16.msra.mxu0 %v362
    %373 = vmatprep.subr.bf16.mxu0 0
    %374 = vmatpush1.bf16.msra.mxu0 %v361
    %375 = vmatprep.subr.bf16.mxu0 0
    %376 = vmatpush1.bf16.msra.mxu0 %v360
    %377 = vmatprep.subr.bf16.mxu0 0
    %378 = vmatpush1.bf16.msra.mxu0 %v359
    %379 = vmatprep.subr.bf16.mxu0 0
    %380 = vmatpush1.bf16.msra.mxu0 %v358
    %381 = vmatprep.subr.bf16.mxu0 0
    %382 = vmatpush1.bf16.msra.mxu0 %v357
    %383 = vmatprep.subr.bf16.mxu0 0
    %384 = vmatpush1.bf16.msra.mxu0 %v356
    %385 = vmatprep.subr.bf16.mxu0 0
    %386 = vmatpush1.bf16.msra.mxu0 %v355
    %387 = vmatprep.subr.bf16.mxu0 0
    %388 = vmatpush2.bf16.msra.mxu0 0
    %389 = vmatprep.subr.bf16.mxu0 0
    %390 = vmatpush2.bf16.msra.mxu0 0
    %391 = vmatprep.subr.bf16.mxu0 0
    %392 = vmatpush2.bf16.msra.mxu0 0
    %393 = vmatprep.subr.bf16.mxu0 0
    %394 = vmatpush2.bf16.msra.mxu0 0
    %395 = vmatprep.subr.bf16.mxu0 0
    %396 = vmatpush2.bf16.msra.mxu0 0
    %397 = vmatprep.subr.bf16.mxu0 0
    %398 = vmatpush2.bf16.msra.mxu0 0
    %399 = vmatprep.subr.bf16.mxu0 0
    %400 = vmatpush2.bf16.msra.mxu0 0
    %401 = vmatprep.subr.bf16.mxu0 0
    %402 = vmatpush2.bf16.msra.mxu0 0
    %403 = vmatprep.mubr.bf16.mxu0 0
    %404 = vmatmul.mubr.bf16.gmra.mxu0 %v299
    %v405 = vpop.f32.mrf.mxu0
    %v406 = vadd.f32 %v321, %v405
    %v407 = vpop.f32.mrf.mxu0
    %v408 = vpop.f32.mrf.mxu0
    %v409 = vpop.f32.mrf.mxu0
    %410 = vdwg.mxu0
    %vm411 = vcmask 64512
    %412 = vst.msk [vmem:[#allocation7] sm:$0xff] %vm411, %v406
    // Predicated region
    $region46: #{tpu_custom_call.1} parent=1 // pred_check
      _
    $region47: #{tpu_custom_call.1} parent=1 // pred_check_branch
      %414 = sbr.rel (0) target = $region49
    $region48: #{tpu_custom_call.1} parent=1 // pred_region
      %s416 = ssub.s32 128, 128
      %417 = vsyncadd [#allocation4], %s416
      %s419 = sshll.u32 [#allocation7], 4
      %s420 = int_to_ptr.vmem [resolvable:$true] %s419
      %422 = dma.vmem_to_hbm [thread:$0]  %s420, 128, %s9, [#allocation4]
    $region49: #{tpu_custom_call.1} parent=1 // pred_fallthru
      _
    // Predicated region
    $region50: #{tpu_custom_call.1} parent=1 // pred_check
      _
    $region51: #{tpu_custom_call.1} parent=1 // pred_check_branch
      %424 = sbr.rel (0) target = $region53
    $region52: #{tpu_custom_call.1} parent=1 // pred_region
      %425 = dma.done [#allocation4], 128
    $region53: #{tpu_custom_call.1} parent=1 // pred_fallthru
      _
    %426 = vsyncpa [#allocation3], 1
    %427 = vsyncpa [#allocation6], 1
    %428 = vsyncpa [#allocation4], 1

</llo_original>
